<compile_context>
chip_gen: v7x
topology: tpu7x:2x2x1
jax: 0.10.0
libtpu: 0.0.40
codegen_flags: <defaults>
</compile_context>

<pallas_src>
import functools

import jax
import jax.numpy as jnp
from jax import lax
from jax.experimental import pallas as pl
from jax.experimental.pallas import tpu as pltpu

LABEL_SMOOTHING = 0.1
_LANE = 128


def _round_up(x, m):
    return ((x + m - 1) // m) * m


def _pad_last(x, target):
    pad = target - x.shape[-1]
    if pad == 0:
        return x
    return jnp.pad(x, [(0, 0)] * (x.ndim - 1) + [(0, pad)])


def _matmul_t(a, b):
    """a: (M, D), b: (N, D) -> (M, N), contracting D (no transpose op, f32 accum)."""
    return lax.dot_general(a, b, (((1,), (1,)), ((), ())),
                           preferred_element_type=jnp.float32)


def contrastive_kernel(text_ref, vis_ref, mask_ref, tq_ref, vq_ref, w_ref, b_ref,
                       loss_ref, tq_row_ref, vq_row_ref, *, include_in_batch):
    eps = LABEL_SMOOTHING

    text = text_ref[...]                      # (B, T, Dp_t) f32
    vis = vis_ref[...]                        # (B, V, Dp_v) f32
    mask = mask_ref[...]                      # (B, T)       f32
    tq = tq_ref[...]                          # (K, Dp_t)    f32 pre-pooled text negatives
    vq = vq_ref[...]                          # (K, Dp_v)    f32 pre-pooled raw vision negatives
    w = w_ref[...]                            # (Dp_v, Dp_t) bf16
    b = b_ref[...]                            # (1, Dp_t)    f32

    B, T, _ = text.shape
    V = vis.shape[1]
    K = tq.shape[0]

    # ---- pool BEFORE projecting (exact: mean(xW+b) == mean(x)W + b) ----
    text_masked_sum = jnp.sum(text * mask[..., None], axis=1)            # (B, Dp_t)
    # NOTE: like the PyTorch module, an all-zero mask row produces inf/NaN here.
    inv_cnt = pl.reciprocal(jnp.sum(mask, axis=-1, keepdims=True), approx=True)
    text_pooled = text_masked_sum * inv_cnt                              # (B, Dp_t)
    vis_pooled_raw = jnp.sum(vis, axis=1) * (1.0 / V)                    # (B, Dp_v)

    # Rows the wrapper enqueues into the pre-pooled queues (dequeue-time pooling
    # with an all-ones mask == sum/T, so enqueue-time pooling is exact).
    tq_row_ref[...] = text_masked_sum * (1.0 / T)                        # mean_T(text*mask)
    vq_row_ref[...] = vis_pooled_raw                                     # mean_V(vision)

    # ---- single fused bf16 MXU projection over [queue ; batch] pooled rows ----
    proj_in = jnp.concatenate([vq, vis_pooled_raw], axis=0).astype(jnp.bfloat16)
    proj = jnp.dot(proj_in, w, preferred_element_type=jnp.float32) + b   # (K+B, Dp_t) f32
    vision_neg_pooled = proj[:K]                                         # (K, Dp_t)
    vision_pooled = proj[K:]                                             # (B, Dp_t)

    # Positive logits == diag(t2v) == diag(v2t).
    pos = jnp.sum(text_pooled * vision_pooled, axis=-1, keepdims=True)   # (B, 1)

    # ---- in-queue label-smoothed CE (label 0 == positive pair) ----
    neg_t = _matmul_t(text_pooled, vision_neg_pooled)                    # (B, K)
    neg_v = _matmul_t(vision_pooled, tq)                                 # (B, K)
    C = 1 + 2 * K
    m = jnp.maximum(pos, jnp.maximum(jnp.max(neg_t, axis=-1, keepdims=True),
                                     jnp.max(neg_v, axis=-1, keepdims=True)))
    sumexp = (jnp.exp(pos - m)
              + jnp.sum(jnp.exp(neg_t - m), axis=-1, keepdims=True)
              + jnp.sum(jnp.exp(neg_v - m), axis=-1, keepdims=True))
    lse = m + jnp.log(sumexp)                                            # (B, 1)
    row_total = (pos + jnp.sum(neg_t, axis=-1, keepdims=True)
                 + jnp.sum(neg_v, axis=-1, keepdims=True))
    per_ex = -((1.0 - eps) * (pos - lse) + (eps / C) * (row_total - C * lse))
    loss = jnp.sum(per_ex) * (1.0 / B)

    # ---- in-batch label-smoothed CE (B != 1 path); v2t == t2v.T -> one matmul ----
    if include_in_batch:
        t2v = _matmul_t(text_pooled, vision_pooled)                      # (B, B)
        s_pos = jnp.sum(pos)                                             # sum of diagonal
        s_all = jnp.sum(t2v)
        m_r = jnp.max(t2v, axis=-1, keepdims=True)
        s_lse_r = jnp.sum(m_r + jnp.log(jnp.sum(jnp.exp(t2v - m_r),
                                                axis=-1, keepdims=True)))
        m_c = jnp.max(t2v, axis=0, keepdims=True)
        s_lse_c = jnp.sum(m_c + jnp.log(jnp.sum(jnp.exp(t2v - m_c),
                                                axis=0, keepdims=True)))

        def smoothed_ce(s_lse):
            return -((1.0 - eps) * (s_pos - s_lse)
                     + (eps / B) * (s_all - B * s_lse)) * (1.0 / B)

        loss = loss + 0.5 * (smoothed_ce(s_lse_r) + smoothed_ce(s_lse_c))

    loss_ref[0, 0] = loss


@functools.partial(jax.jit, static_argnames=("queue_size",), donate_argnums=(3, 4))
def contrastive_alignment_forward(text_embeds, vision_embeds, text_masks,
                                  text_queue, vision_queue, queue_ptr,
                                  proj_w, proj_b, *, queue_size):
    """Forward pass.  `text_queue`/`vision_queue` are stored PRE-POOLED
    ((K, Dp_text) / (K, Dp_vis), lane-padded to x128); the loss is identical to the
    PyTorch module under reduction='mean' (projection/pooling commute exactly)."""
    B, T, d_text = text_embeds.shape
    _, V, d_vis = vision_embeds.shape
    dp_t = _round_up(d_text, _LANE)
    dp_v = _round_up(d_vis, _LANE)

    # Lane-dense layouts for the kernel (no-op when dims are already multiples of 128).
    text_p = _pad_last(text_embeds.astype(jnp.float32), dp_t)
    vis_p = _pad_last(vision_embeds.astype(jnp.float32), dp_v)
    w_p = jnp.pad(proj_w.astype(jnp.float32),
                  ((0, dp_v - d_vis), (0, dp_t - d_text))).astype(jnp.bfloat16)
    b_p = _pad_last(proj_b.astype(jnp.float32).reshape(1, -1), dp_t)

    kernel = functools.partial(contrastive_kernel, include_in_batch=(B != 1))
    loss, tq_rows, vq_rows = pl.pallas_call(
        kernel,
        out_shape=(
            jax.ShapeDtypeStruct((1, 1), jnp.float32),      # scalar loss
            jax.ShapeDtypeStruct((B, dp_t), jnp.float32),   # pre-pooled text rows to enqueue
            jax.ShapeDtypeStruct((B, dp_v), jnp.float32),   # pre-pooled vision rows to enqueue
        ),
        in_specs=[pl.BlockSpec(memory_space=pltpu.MemorySpace.VMEM)] * 7,
        out_specs=(
            pl.BlockSpec(memory_space=pltpu.MemorySpace.SMEM),
            pl.BlockSpec(memory_space=pltpu.MemorySpace.VMEM),
            pl.BlockSpec(memory_space=pltpu.MemorySpace.VMEM),
        ),
        compiler_params=pltpu.CompilerParams(vmem_limit_bytes=32 * 1024 * 1024),
    )(text_p, vis_p, text_masks.astype(jnp.float32), text_queue, vision_queue, w_p, b_p)

    # Ring-buffer writeback: queues are donated, so XLA updates only the B new rows
    # in place.  Like the PyTorch module, assumes queue_size % batch_size == 0.
    ptr = queue_ptr[0]
    new_text_queue = lax.dynamic_update_slice(text_queue, tq_rows, (ptr, 0))
    new_vision_queue = lax.dynamic_update_slice(vision_queue, vq_rows, (ptr, 0))
    new_ptr = (queue_ptr + B) % queue_size
    return loss[0, 0], new_text_queue, new_vision_queue, new_ptr


def _reference_loss(text_embeds, vision_embeds, text_masks,
                    text_queue_full, vision_queue_full, proj_w, proj_b):
    """Pure-JAX f32 mirror of the PyTorch forward (reduction='mean', B != 1)."""
    eps = LABEL_SMOOTHING
    vis_feat = vision_embeds @ proj_w + proj_b
    vis_neg_feat = vision_queue_full @ proj_w + proj_b
    text_m = text_embeds * text_masks[..., None]

    tp = text_m.sum(axis=1) / text_masks.sum(axis=-1, keepdims=True)
    vp = vis_feat.mean(axis=1)
    tnp_ = text_queue_full.mean(axis=1)
    vnp_ = vis_neg_feat.mean(axis=1)

    def ce(logits, labels):
        logp = jax.nn.log_softmax(logits, axis=-1)
        tgt = jnp.take_along_axis(logp, labels[:, None], axis=-1)[:, 0]
        return jnp.mean(-((1 - eps) * tgt + eps * logp.mean(axis=-1)))

    B = text_embeds.shape[0]
    labels = jnp.arange(B)
    in_batch = 0.5 * (ce(tp @ vp.T, labels) + ce(vp @ tp.T, labels))

    pos = jnp.einsum("nd,nd->n", tp, vp)
    neg_t = tp @ vnp_.T
    neg_v = vp @ tnp_.T
    logits = jnp.concatenate([pos[:, None], neg_t, neg_v], axis=-1)
    in_queue = ce(logits, jnp.zeros((B,), jnp.int32))
    return in_batch + in_queue


if __name__ == "__main__":
    B, T, V = 2, 8, 16          # batch, text_max_len, vision_max_len
    D_TEXT, D_VIS = 32, 64      # text_embed_dim, vision_embed_dim
    K = 8                       # queue_size

    key = jax.random.PRNGKey(0)
    k1, k2, k3, k4, k5, k6, k7 = jax.random.split(key, 7)

    text_embeds = jax.random.normal(k1, (B, T, D_TEXT), jnp.float32)
    vision_embeds = jax.random.normal(k2, (B, V, D_VIS), jnp.float32)
    text_masks = (jax.random.uniform(k3, (B, T)) > 0.3).astype(jnp.float32)
    text_masks = text_masks.at[:, 0].set(1.0)   # at least one valid token per row

    # "Logical" full queues (what the PyTorch module stores); randomized so the math
    # is exercised.  The kernel-side queues are stored pre-pooled + lane-padded.
    text_queue_full = 0.1 * jax.random.normal(k4, (K, T, D_TEXT), jnp.float32)
    vision_queue_full = 0.1 * jax.random.normal(k5, (K, V, D_VIS), jnp.float32)
    queue_ptr = jnp.zeros((1,), jnp.int32)

    # proj assumed to be nn.Linear(vision_embed_dim, text_embed_dim): x @ W + b
    proj_w = (jax.random.normal(k6, (D_VIS, D_TEXT), jnp.float32)
              / jnp.sqrt(jnp.float32(D_VIS)))
    proj_b = 0.01 * jax.random.normal(k7, (D_TEXT,), jnp.float32)

    # Enqueue-time pre-pooling of the queue storage (mean over T / V) + lane padding.
    text_queue = _pad_last(text_queue_full.mean(axis=1), _round_up(D_TEXT, _LANE))
    vision_queue = _pad_last(vision_queue_full.mean(axis=1), _round_up(D_VIS, _LANE))

    loss, new_tq, new_vq, new_ptr = contrastive_alignment_forward(
        text_embeds, vision_embeds, text_masks,
        text_queue, vision_queue, queue_ptr,
        proj_w, proj_b, queue_size=K)
    jax.block_until_ready(loss)

    ref = _reference_loss(text_embeds, vision_embeds, text_masks,
                          text_queue_full, vision_queue_full, proj_w, proj_b)
    # bf16 MXU projection + approx-reciprocal pooling => slightly looser tolerance
    # than a pure-f32 path.
    assert jnp.allclose(loss, ref, rtol=2e-2, atol=2e-2), (loss, ref)

    print("KERNEL_OK")
</pallas_src>

<mosaic_0001>
module attributes {stable_mosaic.version = 11 : i64} {
  func.func @contrastive_kernel(%arg0: memref<2x8x128xf32, #tpu.memory_space<vmem>>, %arg1: memref<2x16x128xf32, #tpu.memory_space<vmem>>, %arg2: memref<2x8xf32, #tpu.memory_space<vmem>>, %arg3: memref<8x128xf32, #tpu.memory_space<vmem>>, %arg4: memref<8x128xf32, #tpu.memory_space<vmem>>, %arg5: memref<128x128xbf16, #tpu.memory_space<vmem>>, %arg6: memref<1x128xf32, #tpu.memory_space<vmem>>, %arg7: memref<1x1xf32, #tpu.memory_space<smem>>, %arg8: memref<2x128xf32, #tpu.memory_space<vmem>>, %arg9: memref<2x128xf32, #tpu.memory_space<vmem>>) attributes {dimension_semantics = [], scalar_prefetch = 0 : i64, scratch_operands = 0 : i64, tpu.core_type = #tpu.core_type<tc>} {
    %c0 = arith.constant 0 : index
    %c0_0 = arith.constant 0 : index
    %c0_1 = arith.constant 0 : index
    %0 = vector.load %arg0[%c0, %c0_0, %c0_1] : memref<2x8x128xf32, #tpu.memory_space<vmem>>, vector<2x8x128xf32>
    %c0_2 = arith.constant 0 : index
    %c0_3 = arith.constant 0 : index
    %c0_4 = arith.constant 0 : index
    %1 = vector.load %arg1[%c0_2, %c0_3, %c0_4] : memref<2x16x128xf32, #tpu.memory_space<vmem>>, vector<2x16x128xf32>
    %c0_5 = arith.constant 0 : index
    %c0_6 = arith.constant 0 : index
    %2 = vector.load %arg2[%c0_5, %c0_6] : memref<2x8xf32, #tpu.memory_space<vmem>>, vector<2x8xf32>
    %c0_7 = arith.constant 0 : index
    %c0_8 = arith.constant 0 : index
    %3 = vector.load %arg3[%c0_7, %c0_8] : memref<8x128xf32, #tpu.memory_space<vmem>>, vector<8x128xf32>
    %c0_9 = arith.constant 0 : index
    %c0_10 = arith.constant 0 : index
    %4 = vector.load %arg4[%c0_9, %c0_10] : memref<8x128xf32, #tpu.memory_space<vmem>>, vector<8x128xf32>
    %c0_11 = arith.constant 0 : index
    %c0_12 = arith.constant 0 : index
    %5 = vector.load %arg5[%c0_11, %c0_12] : memref<128x128xbf16, #tpu.memory_space<vmem>>, vector<128x128xbf16>
    %c0_13 = arith.constant 0 : index
    %c0_14 = arith.constant 0 : index
    %6 = vector.load %arg6[%c0_13, %c0_14] : memref<1x128xf32, #tpu.memory_space<vmem>>, vector<1x128xf32>
    %7 = vector.shape_cast %2 : vector<2x8xf32> to vector<2x8x1xf32>
    %8 = vector.broadcast %7 : vector<2x8x1xf32> to vector<2x8x128xf32>
    %9 = arith.mulf %0, %8 : vector<2x8x128xf32>
    %cst = arith.constant dense<0.000000e+00> : vector<2x128xf32>
    %10 = vector.multi_reduction <add>, %9, %cst [1] : vector<2x8x128xf32> to vector<2x128xf32>
    %cst_15 = arith.constant dense<0.000000e+00> : vector<2xf32>
    %11 = vector.multi_reduction <add>, %2, %cst_15 [1] : vector<2x8xf32> to vector<2xf32>
    %12 = vector.shape_cast %11 : vector<2xf32> to vector<2x1xf32>
    %13 = tpu.reciprocal %12 {approx = true} : vector<2x1xf32> -> vector<2x1xf32>
    %14 = vector.broadcast %13 : vector<2x1xf32> to vector<2x128xf32>
    %15 = arith.mulf %10, %14 : vector<2x128xf32>
    %cst_16 = arith.constant dense<0.000000e+00> : vector<2x128xf32>
    %16 = vector.multi_reduction <add>, %1, %cst_16 [1] : vector<2x16x128xf32> to vector<2x128xf32>
    %cst_17 = arith.constant 6.250000e-02 : f32
    %17 = vector.broadcast %cst_17 : f32 to vector<2x128xf32>
    %18 = arith.mulf %16, %17 : vector<2x128xf32>
    %cst_18 = arith.constant 1.250000e-01 : f32
    %19 = vector.broadcast %cst_18 : f32 to vector<2x128xf32>
    %20 = arith.mulf %10, %19 : vector<2x128xf32>
    %c0_19 = arith.constant 0 : index
    %c0_20 = arith.constant 0 : index
    %21 = vector.load %arg8[%c0_19, %c0_20] : memref<2x128xf32, #tpu.memory_space<vmem>>, vector<2x128xf32>
    tpu.vector_store %arg8[%c0_19, %c0_20], %20 {strides = array<i32>} : memref<2x128xf32, #tpu.memory_space<vmem>>, vector<2x128xf32>,
    %c0_21 = arith.constant 0 : index
    %c0_22 = arith.constant 0 : index
    %22 = vector.load %arg9[%c0_21, %c0_22] : memref<2x128xf32, #tpu.memory_space<vmem>>, vector<2x128xf32>
    tpu.vector_store %arg9[%c0_21, %c0_22], %18 {strides = array<i32>} : memref<2x128xf32, #tpu.memory_space<vmem>>, vector<2x128xf32>,
    %23 = tpu.concatenate %4, %18 in 0 : vector<8x128xf32>, vector<2x128xf32> -> vector<10x128xf32>
    %24 = arith.truncf %23 : vector<10x128xf32> to vector<10x128xbf16>
    %cst_23 = arith.constant dense<0.000000e+00> : vector<10x128xf32>
    %25 = tpu.matmul %24, %5, %cst_23 {dimension_numbers = #tpu.dot_dimension_numbers<[1], [0], [0], [1], [0, 0, 1, 1], [], []>} : vector<10x128xbf16>, vector<128x128xbf16>, vector<10x128xf32> -> vector<10x128xf32>
    %26 = vector.broadcast %6 : vector<1x128xf32> to vector<10x128xf32>
    %27 = arith.addf %25, %26 : vector<10x128xf32>
    %28 = vector.extract_strided_slice %27 {offsets = [0, 0], sizes = [8, 128], strides = [1, 1]} : vector<10x128xf32> to vector<8x128xf32>
    %29 = vector.extract_strided_slice %27 {offsets = [8, 0], sizes = [2, 128], strides = [1, 1]} : vector<10x128xf32> to vector<2x128xf32>
    %30 = arith.mulf %15, %29 : vector<2x128xf32>
    %cst_24 = arith.constant dense<0.000000e+00> : vector<2xf32>
    %31 = vector.multi_reduction <add>, %30, %cst_24 [1] : vector<2x128xf32> to vector<2xf32>
    %32 = vector.shape_cast %31 : vector<2xf32> to vector<2x1xf32>
    %cst_25 = arith.constant dense<0.000000e+00> : vector<2x8xf32>
    %33 = tpu.matmul %15, %28, %cst_25 {dimension_numbers = #tpu.dot_dimension_numbers<[1], [1], [0], [0], [0, 0, 1, 0], [], []>} : vector<2x128xf32>, vector<8x128xf32>, vector<2x8xf32> -> vector<2x8xf32>
    %cst_26 = arith.constant dense<0.000000e+00> : vector<2x8xf32>
    %34 = tpu.matmul %29, %3, %cst_26 {dimension_numbers = #tpu.dot_dimension_numbers<[1], [1], [0], [0], [0, 0, 1, 0], [], []>} : vector<2x128xf32>, vector<8x128xf32>, vector<2x8xf32> -> vector<2x8xf32>
    %cst_27 = arith.constant dense<0xFF800000> : vector<2xf32>
    %35 = vector.multi_reduction <maximumf>, %33, %cst_27 [1] : vector<2x8xf32> to vector<2xf32>
    %36 = vector.shape_cast %35 : vector<2xf32> to vector<2x1xf32>
    %cst_28 = arith.constant dense<0xFF800000> : vector<2xf32>
    %37 = vector.multi_reduction <maximumf>, %34, %cst_28 [1] : vector<2x8xf32> to vector<2xf32>
    %38 = vector.shape_cast %37 : vector<2xf32> to vector<2x1xf32>
    %39 = arith.maximumf %36, %38 : vector<2x1xf32>
    %40 = arith.maximumf %32, %39 : vector<2x1xf32>
    %41 = arith.subf %32, %40 : vector<2x1xf32>
    %42 = math.exp %41 : vector<2x1xf32>
    %43 = vector.broadcast %40 : vector<2x1xf32> to vector<2x8xf32>
    %44 = arith.subf %33, %43 : vector<2x8xf32>
    %45 = math.exp %44 : vector<2x8xf32>
    %cst_29 = arith.constant dense<0.000000e+00> : vector<2xf32>
    %46 = vector.multi_reduction <add>, %45, %cst_29 [1] : vector<2x8xf32> to vector<2xf32>
    %47 = vector.shape_cast %46 : vector<2xf32> to vector<2x1xf32>
    %48 = arith.addf %42, %47 : vector<2x1xf32>
    %49 = vector.broadcast %40 : vector<2x1xf32> to vector<2x8xf32>
    %50 = arith.subf %34, %49 : vector<2x8xf32>
    %51 = math.exp %50 : vector<2x8xf32>
    %cst_30 = arith.constant dense<0.000000e+00> : vector<2xf32>
    %52 = vector.multi_reduction <add>, %51, %cst_30 [1] : vector<2x8xf32> to vector<2xf32>
    %53 = vector.shape_cast %52 : vector<2xf32> to vector<2x1xf32>
    %54 = arith.addf %48, %53 : vector<2x1xf32>
    %55 = math.log %54 : vector<2x1xf32>
    %56 = arith.addf %40, %55 : vector<2x1xf32>
    %cst_31 = arith.constant dense<0.000000e+00> : vector<2xf32>
    %57 = vector.multi_reduction <add>, %33, %cst_31 [1] : vector<2x8xf32> to vector<2xf32>
    %58 = vector.shape_cast %57 : vector<2xf32> to vector<2x1xf32>
    %59 = arith.addf %32, %58 : vector<2x1xf32>
    %cst_32 = arith.constant dense<0.000000e+00> : vector<2xf32>
    %60 = vector.multi_reduction <add>, %34, %cst_32 [1] : vector<2x8xf32> to vector<2xf32>
    %61 = vector.shape_cast %60 : vector<2xf32> to vector<2x1xf32>
    %62 = arith.addf %59, %61 : vector<2x1xf32>
    %63 = arith.subf %32, %56 : vector<2x1xf32>
    %cst_33 = arith.constant 0.899999976 : f32
    %64 = vector.broadcast %cst_33 : f32 to vector<2x1xf32>
    %65 = arith.mulf %64, %63 : vector<2x1xf32>
    %cst_34 = arith.constant 1.700000e+01 : f32
    %66 = vector.broadcast %cst_34 : f32 to vector<2x1xf32>
    %67 = arith.mulf %66, %56 : vector<2x1xf32>
    %68 = arith.subf %62, %67 : vector<2x1xf32>
    %cst_35 = arith.constant 0.00588235306 : f32
    %69 = vector.broadcast %cst_35 : f32 to vector<2x1xf32>
    %70 = arith.mulf %69, %68 : vector<2x1xf32>
    %71 = arith.addf %65, %70 : vector<2x1xf32>
    %cst_36 = arith.constant 0.000000e+00 : f32
    %72 = vector.broadcast %cst_36 : f32 to vector<2x1xf32>
    %73 = arith.subf %72, %71 : vector<2x1xf32>
    %74 = vector.shape_cast %73 : vector<2x1xf32> to vector<1x2x1xf32>
    %cst_37 = arith.constant dense<0.000000e+00> : vector<1xf32>
    %75 = vector.multi_reduction <add>, %74, %cst_37 [1, 2] : vector<1x2x1xf32> to vector<1xf32>
    %76 = vector.shape_cast %75 : vector<1xf32> to vector<1x1x1xf32>
    %77 = vector.extract %76[0, 0, 0] : f32 from vector<1x1x1xf32>
    %cst_38 = arith.constant 5.000000e-01 : f32
    %78 = arith.mulf %77, %cst_38 : f32
    %cst_39 = arith.constant dense<0.000000e+00> : vector<2x2xf32>
    %79 = tpu.matmul %15, %29, %cst_39 {dimension_numbers = #tpu.dot_dimension_numbers<[1], [1], [0], [0], [0, 0, 1, 0], [], []>} : vector<2x128xf32>, vector<2x128xf32>, vector<2x2xf32> -> vector<2x2xf32>
    %80 = vector.shape_cast %32 : vector<2x1xf32> to vector<1x2x1xf32>
    %cst_40 = arith.constant dense<0.000000e+00> : vector<1xf32>
    %81 = vector.multi_reduction <add>, %80, %cst_40 [1, 2] : vector<1x2x1xf32> to vector<1xf32>
    %82 = vector.shape_cast %81 : vector<1xf32> to vector<1x1x1xf32>
    %83 = vector.extract %82[0, 0, 0] : f32 from vector<1x1x1xf32>
    %84 = vector.shape_cast %79 : vector<2x2xf32> to vector<1x2x2xf32>
    %cst_41 = arith.constant dense<0.000000e+00> : vector<1xf32>
    %85 = vector.multi_reduction <add>, %84, %cst_41 [1, 2] : vector<1x2x2xf32> to vector<1xf32>
    %86 = vector.shape_cast %85 : vector<1xf32> to vector<1x1x1xf32>
    %87 = vector.extract %86[0, 0, 0] : f32 from vector<1x1x1xf32>
    %cst_42 = arith.constant dense<0xFF800000> : vector<2xf32>
    %88 = vector.multi_reduction <maximumf>, %79, %cst_42 [1] : vector<2x2xf32> to vector<2xf32>
    %89 = vector.shape_cast %88 : vector<2xf32> to vector<2x1xf32>
    %90 = vector.broadcast %89 : vector<2x1xf32> to vector<2x2xf32>
    %91 = arith.subf %79, %90 : vector<2x2xf32>
    %92 = math.exp %91 : vector<2x2xf32>
    %cst_43 = arith.constant dense<0.000000e+00> : vector<2xf32>
    %93 = vector.multi_reduction <add>, %92, %cst_43 [1] : vector<2x2xf32> to vector<2xf32>
    %94 = vector.shape_cast %93 : vector<2xf32> to vector<2x1xf32>
    %95 = math.log %94 : vector<2x1xf32>
    %96 = arith.addf %89, %95 : vector<2x1xf32>
    %97 = vector.shape_cast %96 : vector<2x1xf32> to vector<1x2x1xf32>
    %cst_44 = arith.constant dense<0.000000e+00> : vector<1xf32>
    %98 = vector.multi_reduction <add>, %97, %cst_44 [1, 2] : vector<1x2x1xf32> to vector<1xf32>
    %99 = vector.shape_cast %98 : vector<1xf32> to vector<1x1x1xf32>
    %100 = vector.extract %99[0, 0, 0] : f32 from vector<1x1x1xf32>
    %cst_45 = arith.constant dense<0xFF800000> : vector<2xf32>
    %101 = vector.multi_reduction <maximumf>, %79, %cst_45 [0] : vector<2x2xf32> to vector<2xf32>
    %102 = vector.shape_cast %101 : vector<2xf32> to vector<1x2xf32>
    %103 = vector.broadcast %102 : vector<1x2xf32> to vector<2x2xf32>
    %104 = arith.subf %79, %103 : vector<2x2xf32>
    %105 = math.exp %104 : vector<2x2xf32>
    %cst_46 = arith.constant dense<0.000000e+00> : vector<2xf32>
    %106 = vector.multi_reduction <add>, %105, %cst_46 [0] : vector<2x2xf32> to vector<2xf32>
    %107 = vector.shape_cast %106 : vector<2xf32> to vector<1x2xf32>
    %108 = math.log %107 : vector<1x2xf32>
    %109 = arith.addf %102, %108 : vector<1x2xf32>
    %110 = vector.shape_cast %109 : vector<1x2xf32> to vector<1x1x2xf32>
    %cst_47 = arith.constant dense<0.000000e+00> : vector<1xf32>
    %111 = vector.multi_reduction <add>, %110, %cst_47 [1, 2] : vector<1x1x2xf32> to vector<1xf32>
    %112 = vector.shape_cast %111 : vector<1xf32> to vector<1x1x1xf32>
    %113 = vector.extract %112[0, 0, 0] : f32 from vector<1x1x1xf32>
    %114 = arith.subf %83, %100 : f32
    %cst_48 = arith.constant 0.899999976 : f32
    %115 = arith.mulf %cst_48, %114 : f32
    %cst_49 = arith.constant 2.000000e+00 : f32
    %116 = arith.mulf %cst_49, %100 : f32
    %117 = arith.subf %87, %116 : f32
    %cst_50 = arith.constant 5.000000e-02 : f32
    %118 = arith.mulf %cst_50, %117 : f32
    %119 = arith.addf %115, %118 : f32
    %cst_51 = arith.constant 0.000000e+00 : f32
    %120 = arith.subf %cst_51, %119 : f32
    %cst_52 = arith.constant 5.000000e-01 : f32
    %121 = arith.mulf %120, %cst_52 : f32
    %122 = arith.subf %83, %113 : f32
    %cst_53 = arith.constant 0.899999976 : f32
    %123 = arith.mulf %cst_53, %122 : f32
    %cst_54 = arith.constant 2.000000e+00 : f32
    %124 = arith.mulf %cst_54, %113 : f32
    %125 = arith.subf %87, %124 : f32
    %cst_55 = arith.constant 5.000000e-02 : f32
    %126 = arith.mulf %cst_55, %125 : f32
    %127 = arith.addf %123, %126 : f32
    %cst_56 = arith.constant 0.000000e+00 : f32
    %128 = arith.subf %cst_56, %127 : f32
    %cst_57 = arith.constant 5.000000e-01 : f32
    %129 = arith.mulf %128, %cst_57 : f32
    %130 = arith.addf %121, %129 : f32
    %cst_58 = arith.constant 5.000000e-01 : f32
    %131 = arith.mulf %cst_58, %130 : f32
    %132 = arith.addf %78, %131 : f32
    %c0_59 = arith.constant 0 : index
    %c0_60 = arith.constant 0 : index
    %133 = memref.load %arg7[%c0_59, %c0_60] : memref<1x1xf32, #tpu.memory_space<smem>>
    memref.store %132, %arg7[%c0_59, %c0_60] : memref<1x1xf32, #tpu.memory_space<smem>>
    return
  }
}

</mosaic_0001>

<llo_original>
// kernel: contrastive_alignment_forward.1
$region0: #{contrastive_alignment_forward.1}
  #allocation0 [shape = 'u32[]', space=smem, size = 0x4, offset = 0x4, fixed_abs, tag = 'smem constant byte address 0x4 - core index']
  #allocation1 [shape = 'u32[144,128]{1,0:T(1,128)}', space=vmem, size = 0x12000, scoped, tag = 'internal scratch']
  %s0 = inlined_call_operand.vmem [shape: f32[2,8,128], index: 0, kind: input, shape index: {}]
  %s1 = inlined_call_operand.vmem [shape: f32[2,16,128], index: 1, kind: input, shape index: {}]
  %s2 = inlined_call_operand.vmem [shape: f32[2,8], index: 2, kind: input, shape index: {}]
  %s3 = inlined_call_operand.vmem [shape: f32[8,128], index: 3, kind: input, shape index: {}]
  %s4 = inlined_call_operand.vmem [shape: f32[8,128], index: 4, kind: input, shape index: {}]
  %s5 = inlined_call_operand.vmem [shape: bf16[128,128], index: 5, kind: input, shape index: {}]
  %s6 = inlined_call_operand.vmem [shape: f32[1,128], index: 6, kind: input, shape index: {}]
  %s7 = inlined_call_operand.hbm [shape: f32[1,1], index: 7, kind: output, shape index: {0}]
  %s8 = inlined_call_operand.vmem [shape: f32[2,128], index: 8, kind: output, shape index: {1}]
  %s9 = inlined_call_operand.vmem [shape: f32[2,128], index: 9, kind: output, shape index: {2}]
  %10 = xla_tuple %s7, %s8, %s9
  %s11 = sld [smem:[#allocation0]]
  $region54: #{contrastive_alignment_forward.1} parent=0
    _
  %s13 = ssub.s32 1, %s11
  %s14 = scalar_select 0, %s13, %s11
  $region1: #{contrastive_alignment_forward.1} parent=0
    #allocation2 [shape = 'u8[512]{0}', space=smem, size = 0x200, scoped, tag = 'output window, operand 0, single buffered']
    #allocation3 [shape = 's32[1]{0}', space=sflag, size = 0x4, scoped, tag = 'scoped memory for contrastive_alignment_forward.1']
    %15 = vsyncpa [#allocation3], 0
    // Predicated region
    $region2: #{contrastive_alignment_forward.1} parent=1 // pred_check
      _
    $region3: #{contrastive_alignment_forward.1} parent=1 // pred_check_branch
      %17 = sbr.rel (0) target = $region5
    $region4: #{contrastive_alignment_forward.1} parent=1 // pred_region
      _
    $region5: #{contrastive_alignment_forward.1} parent=1 // pred_fallthru
      _
    // Predicated region
    $region6: #{contrastive_alignment_forward.1} parent=1 // pred_check
      _
    $region7: #{contrastive_alignment_forward.1} parent=1 // pred_check_branch
      %19 = sbr.rel (0) target = $region9
    $region8: #{contrastive_alignment_forward.1} parent=1 // pred_region
      _
    $region9: #{contrastive_alignment_forward.1} parent=1 // pred_fallthru
      _
    // Predicated region
    $region10: #{contrastive_alignment_forward.1} parent=1 // pred_check
      _
    $region11: #{contrastive_alignment_forward.1} parent=1 // pred_check_branch
      %21 = sbr.rel (0) target = $region13
    $region12: #{contrastive_alignment_forward.1} parent=1 // pred_region
      _
    $region13: #{contrastive_alignment_forward.1} parent=1 // pred_fallthru
      _
    // Predicated region
    $region14: #{contrastive_alignment_forward.1} parent=1 // pred_check
      _
    $region15: #{contrastive_alignment_forward.1} parent=1 // pred_check_branch
      %23 = sbr.rel (0) target = $region17
    $region16: #{contrastive_alignment_forward.1} parent=1 // pred_region
      _
    $region17: #{contrastive_alignment_forward.1} parent=1 // pred_fallthru
      _
    // Predicated region
    $region18: #{contrastive_alignment_forward.1} parent=1 // pred_check
      _
    $region19: #{contrastive_alignment_forward.1} parent=1 // pred_check_branch
      %25 = sbr.rel (0) target = $region21
    $region20: #{contrastive_alignment_forward.1} parent=1 // pred_region
      _
    $region21: #{contrastive_alignment_forward.1} parent=1 // pred_fallthru
      _
    // Predicated region
    $region22: #{contrastive_alignment_forward.1} parent=1 // pred_check
      _
    $region23: #{contrastive_alignment_forward.1} parent=1 // pred_check_branch
      %27 = sbr.rel (0) target = $region25
    $region24: #{contrastive_alignment_forward.1} parent=1 // pred_region
      _
    $region25: #{contrastive_alignment_forward.1} parent=1 // pred_fallthru
      _
    // Predicated region
    $region26: #{contrastive_alignment_forward.1} parent=1 // pred_check
      _
    $region27: #{contrastive_alignment_forward.1} parent=1 // pred_check_branch
      %29 = sbr.rel (0) target = $region29
    $region28: #{contrastive_alignment_forward.1} parent=1 // pred_region
      _
    $region29: #{contrastive_alignment_forward.1} parent=1 // pred_fallthru
      _
    %v31 = vld [vmem:[%s0] sm:$0xff]
    %v32 = vld [vmem:[%s0 + $0x8] sm:$0xff]
    %v33 = vld [vmem:[%s1] sm:$0xff]
    %v34 = vld [vmem:[%s1 + $0x8] sm:$0xff]
    %v35 = vld [vmem:[%s1 + $0x10] sm:$0xff]
    %v36 = vld [vmem:[%s1 + $0x18] sm:$0xff]
    %v37 = vld [vmem:[%s2] sm:$0x3]
    %v38 = vld [vmem:[%s3] sm:$0xff]
    %v39 = vld [vmem:[%s4] sm:$0xff]
    %v40 = vld [vmem:[%s5] sm:$0xf]
    %v41 = vld [vmem:[%s5 + $0x4] sm:$0xf]
    %v42 = vld [vmem:[%s5 + $0x8] sm:$0xf]
    %v43 = vld [vmem:[%s5 + $0xc] sm:$0xf]
    %v44 = vld [vmem:[%s5 + $0x10] sm:$0xf]
    %v45 = vld [vmem:[%s5 + $0x14] sm:$0xf]
    %v46 = vld [vmem:[%s5 + $0x18] sm:$0xf]
    %v47 = vld [vmem:[%s5 + $0x1c] sm:$0xf]
    %v48 = vld [vmem:[%s5 + $0x20] sm:$0xf]
    %v49 = vld [vmem:[%s5 + $0x24] sm:$0xf]
    %v50 = vld [vmem:[%s5 + $0x28] sm:$0xf]
    %v51 = vld [vmem:[%s5 + $0x2c] sm:$0xf]
    %v52 = vld [vmem:[%s5 + $0x30] sm:$0xf]
    %v53 = vld [vmem:[%s5 + $0x34] sm:$0xf]
    %v54 = vld [vmem:[%s5 + $0x38] sm:$0xf]
    %v55 = vld [vmem:[%s5 + $0x3c] sm:$0xf]
    %v56 = vld [vmem:[%s6] sm:$0x1]
    %v57 = vlaneseq
    %v58 = vshrl.u32 %v57, 7
    %v59 = vsub.s32 0, %v58
    %v60 = vrot.slane %v37, %v59
    %62 = vbcast.lane.b32.xlu0 %v60, 256
    %v63 = vpop.permute.xlu0 %62
    %v64 = vlaneseq
    %v65 = vshrl.u32 %v64, 7
    %v66 = vsub.s32 1, %v65
    %v67 = vrot.slane %v37, %v66
    %69 = vbcast.lane.b32.xlu0 %v67, 256
    %v70 = vpop.permute.xlu0 %69
    %v71 = vmul.f32 %v31, %v63
    %v72 = vmul.f32 %v32, %v70
    %v73 = vrot.slane %v71, 4
    %v74 = vadd.f32 %v71, %v73
    %v75 = vrot.slane %v74, 2
    %v76 = vadd.f32 %v74, %v75
    %v77 = vrot.slane %v76, 1
    %v78 = vadd.f32 %v76, %v77
    %v79 = vrot.slane %v72, 4
    %v80 = vadd.f32 %v72, %v79
    %v81 = vrot.slane %v80, 2
    %v82 = vadd.f32 %v80, %v81
    %v83 = vrot.slane %v82, 1
    %v84 = vadd.f32 %v82, %v83
    %vm85 = vcmask 58368
    %v86 = vsel %vm85, %v37, 0.0
    %87 = vadd.xlane.f32.xlu0 %v86
    %v88 = vpop.xlane.xlu0 %87
    %v89 = vrcp.pop %v88
    %v91 = vrot.slane %v89, 1
    %v94 = vmul.f32 %v78, %v89
    %v95 = vmul.f32 %v84, %v91
    %v96 = vadd.f32 %v33, %v34
    %v97 = vrot.slane %v96, 4
    %v98 = vadd.f32 %v96, %v97
    %v99 = vrot.slane %v98, 2
    %v100 = vadd.f32 %v98, %v99
    %v101 = vrot.slane %v100, 1
    %v102 = vadd.f32 %v100, %v101
    %v103 = vadd.f32 %v35, %v36
    %v104 = vrot.slane %v103, 4
    %v105 = vadd.f32 %v103, %v104
    %v106 = vrot.slane %v105, 2
    %v107 = vadd.f32 %v105, %v106
    %v108 = vrot.slane %v107, 1
    %v109 = vadd.f32 %v107, %v108
    %v110 = vmul.f32 %v102, 0.0625
    %v111 = vmul.f32 %v109, 0.0625
    %v112 = vmul.f32 %v78, 0.125
    %v113 = vmul.f32 %v84, 0.125
    %vm116 = vcmask 1041409
    %v117 = vsel %vm116, %v113, %v112
    %119 = vst [vmem:[%s8] sm:$0x3] %v117
    %v122 = vsel %vm116, %v111, %v110
    %124 = vst [vmem:[%s9] sm:$0x3] %v122
    %v125 = vpack.c.bf16 %v122, %v39
    %v127 = vlaneseq
    %v128 = vshrl.u32 %v127, 7
    %v129 = vsub.s32 0, %v128
    %v130 = vrot.slane %v56, %v129
    %v148 = vunpack.c.l.b16 %v40
    %v149 = vunpack.c.l.b16 %v41
    %v150 = vunpack.c.l.b16 %v42
    %v151 = vunpack.c.l.b16 %v43
    %v152 = vunpack.c.l.b16 %v44
    %v153 = vunpack.c.l.b16 %v45
    %v154 = vunpack.c.l.b16 %v46
    %v155 = vunpack.c.l.b16 %v47
    %v156 = vunpack.c.l.b16 %v48
    %v157 = vunpack.c.l.b16 %v49
    %v158 = vunpack.c.l.b16 %v50
    %v159 = vunpack.c.l.b16 %v51
    %v160 = vunpack.c.l.b16 %v52
    %v161 = vunpack.c.l.b16 %v53
    %v162 = vunpack.c.l.b16 %v54
    %v163 = vunpack.c.l.b16 %v55
    %v164 = vpack.c.b16 %v149, %v148
    %v165 = vpack.c.b16 %v151, %v150
    %v166 = vpack.c.b16 %v153, %v152
    %v167 = vpack.c.b16 %v155, %v154
    %v168 = vpack.c.b16 %v157, %v156
    %v169 = vpack.c.b16 %v159, %v158
    %v170 = vpack.c.b16 %v161, %v160
    %v171 = vpack.c.b16 %v163, %v162
    %180 = vmatprep.subr.bf16.mxu0 0
    %181 = vmatpush1.bf16.msra.mxu0 %v164
    %182 = vmatprep.subr.bf16.mxu0 0
    %183 = vmatpush1.bf16.msra.mxu0 %v165
    %184 = vmatprep.subr.bf16.mxu0 0
    %185 = vmatpush1.bf16.msra.mxu0 %v166
    %186 = vmatprep.subr.bf16.mxu0 0
    %187 = vmatpush1.bf16.msra.mxu0 %v167
    %188 = vmatprep.subr.bf16.mxu0 0
    %189 = vmatpush1.bf16.msra.mxu0 %v168
    %190 = vmatprep.subr.bf16.mxu0 0
    %191 = vmatpush1.bf16.msra.mxu0 %v169
    %192 = vmatprep.subr.bf16.mxu0 0
    %193 = vmatpush1.bf16.msra.mxu0 %v170
    %194 = vmatprep.subr.bf16.mxu0 0
    %195 = vmatpush1.bf16.msra.mxu0 %v171
    %196 = vmatprep.subr.bf16.mxu0 0
    %197 = vmatpush1.bf16.msra.mxu0 0
    %198 = vmatprep.subr.bf16.mxu0 0
    %199 = vmatpush1.bf16.msra.mxu0 0
    %200 = vmatprep.subr.bf16.mxu0 0
    %201 = vmatpush1.bf16.msra.mxu0 0
    %202 = vmatprep.subr.bf16.mxu0 0
    %203 = vmatpush1.bf16.msra.mxu0 0
    %204 = vmatprep.subr.bf16.mxu0 0
    %205 = vmatpush1.bf16.msra.mxu0 0
    %206 = vmatprep.subr.bf16.mxu0 0
    %207 = vmatpush1.bf16.msra.mxu0 0
    %208 = vmatprep.subr.bf16.mxu0 0
    %209 = vmatpush1.bf16.msra.mxu0 0
    %210 = vmatprep.subr.bf16.mxu0 0
    %211 = vmatpush1.bf16.msra.mxu0 0
    %212 = vmatprep.mubr.bf16.mxu0 0
    %213 = vmatmul.mubr.bf16.gmra.mrb[0].mxu0 %v125
    %v214 = vpop.f32.mrb[0].mxu0
    %v215 = vadd.f32 %v130, %v214
    %v216 = vpop.f32.mrb[0].mxu0
    %v217 = vpop.f32.mrb[0].mxu0
    %v218 = vadd.f32 %v130, %v217
    %v219 = vpop.f32.mrb[0].mxu0
    %220 = vdwg.mxu0
    %v222 = vrot.slane %v218, 1
    %v225 = vmul.f32 %v94, %v218
    %v226 = vmul.f32 %v95, %v222
    %v229 = vrot.slane %v226, 7
    %v230 = vsel %vm116, %v229, %v225
    %vm232 = vcmask 1041408
    %v233 = vsel %vm232, %v230, 0.0
    %234 = vadd.xlane.f32.xlu0 %v233
    %v235 = vpop.xlane.xlu0 %234
    %v238 = vrot.slane %v95, 7
    %v239 = vsel %vm116, %v238, %v94
    %241 = vmatprep.subr.mxu0 0.0
    %242 = vmatpush1.xpose.msra.mxu0 %v215
    %243 = vmatprep.subr.mxu0 0.0
    %244 = vmatpush1.xpose.msra.mxu0 0.0
    %245 = vmatprep.subr.mxu0 0.0
    %246 = vmatpush1.xpose.msra.mxu0 0.0
    %247 = vmatprep.subr.mxu0 0.0
    %248 = vmatpush1.xpose.msra.mxu0 0.0
    %249 = vmatprep.subr.mxu0 0.0
    %250 = vmatpush1.xpose.msra.mxu0 0.0
    %251 = vmatprep.subr.mxu0 0.0
    %252 = vmatpush1.xpose.msra.mxu0 0.0
    %253 = vmatprep.subr.mxu0 0.0
    %254 = vmatpush1.xpose.msra.mxu0 0.0
    %255 = vmatprep.subr.mxu0 0.0
    %256 = vmatpush1.xpose.msra.mxu0 0.0
    %257 = vmatprep.subr.mxu0 0.0
    %258 = vmatpush1.xpose.msra.mxu0 0.0
    %259 = vmatprep.subr.mxu0 0.0
    %260 = vmatpush1.xpose.msra.mxu0 0.0
    %261 = vmatprep.subr.mxu0 0.0
    %262 = vmatpush1.xpose.msra.mxu0 0.0
    %263 = vmatprep.subr.mxu0 0.0
    %264 = vmatpush1.xpose.msra.mxu0 0.0
    %265 = vmatprep.subr.mxu0 0.0
    %266 = vmatpush1.xpose.msra.mxu0 0.0
    %267 = vmatprep.subr.mxu0 0.0
    %268 = vmatpush1.xpose.msra.mxu0 0.0
    %269 = vmatprep.subr.mxu0 0.0
    %270 = vmatpush1.xpose.msra.mxu0 0.0
    %271 = vmatprep.subr.mxu0 0.0
    %272 = vmatpush1.xpose.msra.mxu0 0.0
    %273 = vmatprep.subr.mxu0 0.0
    %274 = vmatpush1.xpose.msra.mxu0 0.0
    %275 = vmatprep.subr.mxu0 0.0
    %276 = vmatpush1.xpose.msra.mxu0 0.0
    %277 = vmatprep.subr.mxu0 0.0
    %278 = vmatpush1.xpose.msra.mxu0 0.0
    %279 = vmatprep.subr.mxu0 0.0
    %280 = vmatpush1.xpose.msra.mxu0 0.0
    %281 = vmatprep.subr.mxu0 0.0
    %282 = vmatpush1.xpose.msra.mxu0 0.0
    %283 = vmatprep.subr.mxu0 0.0
    %284 = vmatpush1.xpose.msra.mxu0 0.0
    %285 = vmatprep.subr.mxu0 0.0
    %286 = vmatpush1.xpose.msra.mxu0 0.0
    %287 = vmatprep.subr.mxu0 0.0
    %288 = vmatpush1.xpose.msra.mxu0 0.0
    %289 = vmatprep.subr.mxu0 0.0
    %290 = vmatpush1.xpose.msra.mxu0 0.0
    %291 = vmatprep.subr.mxu0 0.0
    %292 = vmatpush1.xpose.msra.mxu0 0.0
    %293 = vmatprep.subr.mxu0 0.0
    %294 = vmatpush1.xpose.msra.mxu0 0.0
    %295 = vmatprep.subr.mxu0 0.0
    %296 = vmatpush1.xpose.msra.mxu0 0.0
    %297 = vmatprep.subr.mxu0 0.0
    %298 = vmatpush1.xpose.msra.mxu0 0.0
    %299 = vmatprep.subr.mxu0 0.0
    %300 = vmatpush1.xpose.msra.mxu0 0.0
    %301 = vmatprep.subr.mxu0 0.0
    %302 = vmatpush1.xpose.msra.mxu0 0.0
    %303 = vmatprep.subr.mxu0 0.0
    %304 = vmatpush1.xpose.msra.mxu0 0.0
    %305 = vmatprep.mubr.f32.mxu0 0.0
    %306 = vmatmul.mubr.f32.gmra.mrb[0].mxu0 %v239
    %v307 = vpop.f32.mrb[0].mxu0
    %v308 = vadd.f32 0.0, %v307
    %v309 = vpop.f32.mrb[0].mxu0
    %310 = vdwg.mxu0
    %311 = vmatprep.subr.mxu0 0.0
    %312 = vmatpush1.xpose.msra.mxu0 %v38
    %313 = vmatprep.subr.mxu0 0.0
    %314 = vmatpush1.xpose.msra.mxu0 0.0
    %315 = vmatprep.subr.mxu0 0.0
    %316 = vmatpush1.xpose.msra.mxu0 0.0
    %317 = vmatprep.subr.mxu0 0.0
    %318 = vmatpush1.xpose.msra.mxu0 0.0
    %319 = vmatprep.subr.mxu0 0.0
    %320 = vmatpush1.xpose.msra.mxu0 0.0
    %321 = vmatprep.subr.mxu0 0.0
    %322 = vmatpush1.xpose.msra.mxu0 0.0
    %323 = vmatprep.subr.mxu0 0.0
    %324 = vmatpush1.xpose.msra.mxu0 0.0
    %325 = vmatprep.subr.mxu0 0.0
    %326 = vmatpush1.xpose.msra.mxu0 0.0
    %327 = vmatprep.subr.mxu0 0.0
    %328 = vmatpush1.xpose.msra.mxu0 0.0
    %329 = vmatprep.subr.mxu0 0.0
    %330 = vmatpush1.xpose.msra.mxu0 0.0
    %331 = vmatprep.subr.mxu0 0.0
    %332 = vmatpush1.xpose.msra.mxu0 0.0
    %333 = vmatprep.subr.mxu0 0.0
    %334 = vmatpush1.xpose.msra.mxu0 0.0
    %335 = vmatprep.subr.mxu0 0.0
    %336 = vmatpush1.xpose.msra.mxu0 0.0
    %337 = vmatprep.subr.mxu0 0.0
    %338 = vmatpush1.xpose.msra.mxu0 0.0
    %339 = vmatprep.subr.mxu0 0.0
    %340 = vmatpush1.xpose.msra.mxu0 0.0
    %341 = vmatprep.subr.mxu0 0.0
    %342 = vmatpush1.xpose.msra.mxu0 0.0
    %343 = vmatprep.subr.mxu0 0.0
    %344 = vmatpush1.xpose.msra.mxu0 0.0
    %345 = vmatprep.subr.mxu0 0.0
    %346 = vmatpush1.xpose.msra.mxu0 0.0
    %347 = vmatprep.subr.mxu0 0.0
    %348 = vmatpush1.xpose.msra.mxu0 0.0
    %349 = vmatprep.subr.mxu0 0.0
    %350 = vmatpush1.xpose.msra.mxu0 0.0
    %351 = vmatprep.subr.mxu0 0.0
    %352 = vmatpush1.xpose.msra.mxu0 0.0
    %353 = vmatprep.subr.mxu0 0.0
    %354 = vmatpush1.xpose.msra.mxu0 0.0
    %355 = vmatprep.subr.mxu0 0.0
    %356 = vmatpush1.xpose.msra.mxu0 0.0
    %357 = vmatprep.subr.mxu0 0.0
    %358 = vmatpush1.xpose.msra.mxu0 0.0
    %359 = vmatprep.subr.mxu0 0.0
    %360 = vmatpush1.xpose.msra.mxu0 0.0
    %361 = vmatprep.subr.mxu0 0.0
    %362 = vmatpush1.xpose.msra.mxu0 0.0
    %363 = vmatprep.subr.mxu0 0.0
    %364 = vmatpush1.xpose.msra.mxu0 0.0
    %365 = vmatprep.subr.mxu0 0.0
    %366 = vmatpush1.xpose.msra.mxu0 0.0
    %367 = vmatprep.subr.mxu0 0.0
    %368 = vmatpush1.xpose.msra.mxu0 0.0
    %369 = vmatprep.subr.mxu0 0.0
    %370 = vmatpush1.xpose.msra.mxu0 0.0
    %371 = vmatprep.subr.mxu0 0.0
    %372 = vmatpush1.xpose.msra.mxu0 0.0
    %373 = vmatprep.subr.mxu0 0.0
    %374 = vmatpush1.xpose.msra.mxu0 0.0
    %375 = vmatprep.mubr.f32.mxu0 0.0
    %376 = vmatmul.mubr.f32.gmra.mrb[0].mxu0 %v218
    %v377 = vpop.f32.mrb[0].mxu0
    %v378 = vadd.f32 0.0, %v377
    %v379 = vpop.f32.mrb[0].mxu0
    %380 = vdwg.mxu0
    %v381 = vsel %vm85, %v308, -inf
    %382 = vmax.xlane.f32.xlu0 %v381
    %v383 = vpop.xlane.xlu0 %382
    %v384 = vsel %vm85, %v378, -inf
    %385 = vmax.xlane.f32.xlu0 %v384
    %v386 = vpop.xlane.xlu0 %385
    %v387 = vmax.f32 %v383, %v386
    %v388 = vmax.f32 %v235, %v387
    %v389 = vsub.f32 %v235, %v388
    %v390 = vmul.f32 %v389, 1.442695
    %v391 = vpow.pop %v390
    %v392 = vsub.f32 %v308, %v388
    %v393 = vmul.f32 %v392, 1.442695
    %v394 = vpow.pop %v393
    %v395 = vsel %vm85, %v394, 0.0
    %396 = vadd.xlane.f32.xlu0 %v395
    %v397 = vpop.xlane.xlu0 %396
    %v398 = vadd.f32 %v391, %v397
    %v399 = vsub.f32 %v378, %v388
    %v400 = vmul.f32 %v399, 1.442695
    %v401 = vpow.pop %v400
    %v402 = vsel %vm85, %v401, 0.0
    %403 = vadd.xlane.f32.xlu0 %v402
    %v404 = vpop.xlane.xlu0 %403
    %v405 = vadd.f32 %v398, %v404
    %v406 = vlog2.pop %v405
    %v407 = vmul.f32 %v406, 0.6931472
    %v408 = vadd.f32 %v388, %v407
    %v409 = vsel %vm85, %v308, 0.0
    %410 = vadd.xlane.f32.xlu0 %v409
    %v411 = vpop.xlane.xlu0 %410
    %v412 = vadd.f32 %v235, %v411
    %v413 = vsel %vm85, %v378, 0.0
    %414 = vadd.xlane.f32.xlu0 %v413
    %v415 = vpop.xlane.xlu0 %414
    %v416 = vadd.f32 %v412, %v415
    %v417 = vsub.f32 %v235, %v408
    %v418 = vmul.f32 %v417, 0.9
    %v419 = vmul.f32 %v408, 17.0
    %v420 = vsub.f32 %v416, %v419
    %v421 = vmul.f32 %v420, 0.005882353
    %v422 = vadd.f32 %v418, %v421
    %v423 = vsub.f32 0.0, %v422
    %vm424 = vcmask 1024
    %v425 = vsel %vm424, %v423, 0.0
    %426 = vadd.xlane.f32.xlu0 %v425
    %v427 = vpop.xlane.xlu0 %426
    %v428 = vrot.slane %v427, 4
    %v429 = vadd.f32 %v427, %v428
    %v430 = vrot.slane %v429, 2
    %v431 = vadd.f32 %v429, %v430
    %v432 = vrot.slane %v431, 1
    %v433 = vadd.f32 %v431, %v432
    %s434 = vtos %v433
    %s435 = smul.f32 %s434, 0.5
    %436 = vmatprep.subr.mxu0 0.0
    %437 = vmatpush1.xpose.msra.mxu0 %v218
    %438 = vmatprep.subr.mxu0 0.0
    %439 = vmatpush1.xpose.msra.mxu0 0.0
    %440 = vmatprep.subr.mxu0 0.0
    %441 = vmatpush1.xpose.msra.mxu0 0.0
    %442 = vmatprep.subr.mxu0 0.0
    %443 = vmatpush1.xpose.msra.mxu0 0.0
    %444 = vmatprep.subr.mxu0 0.0
    %445 = vmatpush1.xpose.msra.mxu0 0.0
    %446 = vmatprep.subr.mxu0 0.0
    %447 = vmatpush1.xpose.msra.mxu0 0.0
    %448 = vmatprep.subr.mxu0 0.0
    %449 = vmatpush1.xpose.msra.mxu0 0.0
    %450 = vmatprep.subr.mxu0 0.0
    %451 = vmatpush1.xpose.msra.mxu0 0.0
    %452 = vmatprep.subr.mxu0 0.0
    %453 = vmatpush1.xpose.msra.mxu0 0.0
    %454 = vmatprep.subr.mxu0 0.0
    %455 = vmatpush1.xpose.msra.mxu0 0.0
    %456 = vmatprep.subr.mxu0 0.0
    %457 = vmatpush1.xpose.msra.mxu0 0.0
    %458 = vmatprep.subr.mxu0 0.0
    %459 = vmatpush1.xpose.msra.mxu0 0.0
    %460 = vmatprep.subr.mxu0 0.0
    %461 = vmatpush1.xpose.msra.mxu0 0.0
    %462 = vmatprep.subr.mxu0 0.0
    %463 = vmatpush1.xpose.msra.mxu0 0.0
    %464 = vmatprep.subr.mxu0 0.0
    %465 = vmatpush1.xpose.msra.mxu0 0.0
    %466 = vmatprep.subr.mxu0 0.0
    %467 = vmatpush1.xpose.msra.mxu0 0.0
    %468 = vmatprep.subr.mxu0 0.0
    %469 = vmatpush1.xpose.msra.mxu0 0.0
    %470 = vmatprep.subr.mxu0 0.0
    %471 = vmatpush1.xpose.msra.mxu0 0.0
    %472 = vmatprep.subr.mxu0 0.0
    %473 = vmatpush1.xpose.msra.mxu0 0.0
    %474 = vmatprep.subr.mxu0 0.0
    %475 = vmatpush1.xpose.msra.mxu0 0.0
    %476 = vmatprep.subr.mxu0 0.0
    %477 = vmatpush1.xpose.msra.mxu0 0.0
    %478 = vmatprep.subr.mxu0 0.0
    %479 = vmatpush1.xpose.msra.mxu0 0.0
    %480 = vmatprep.subr.mxu0 0.0
    %481 = vmatpush1.xpose.msra.mxu0 0.0
    %482 = vmatprep.subr.mxu0 0.0
    %483 = vmatpush1.xpose.msra.mxu0 0.0
    %484 = vmatprep.subr.mxu0 0.0
    %485 = vmatpush1.xpose.msra.mxu0 0.0
    %486 = vmatprep.subr.mxu0 0.0
    %487 = vmatpush1.xpose.msra.mxu0 0.0
    %488 = vmatprep.subr.mxu0 0.0
    %489 = vmatpush1.xpose.msra.mxu0 0.0
    %490 = vmatprep.subr.mxu0 0.0
    %491 = vmatpush1.xpose.msra.mxu0 0.0
    %492 = vmatprep.subr.mxu0 0.0
    %493 = vmatpush1.xpose.msra.mxu0 0.0
    %494 = vmatprep.subr.mxu0 0.0
    %495 = vmatpush1.xpose.msra.mxu0 0.0
    %496 = vmatprep.subr.mxu0 0.0
    %497 = vmatpush1.xpose.msra.mxu0 0.0
    %498 = vmatprep.subr.mxu0 0.0
    %499 = vmatpush1.xpose.msra.mxu0 0.0
    %500 = vmatprep.mubr.f32.mxu0 0.0
    %501 = vmatmul.mubr.f32.gmra.mrb[0].mxu0 %v239
    %v502 = vpop.f32.mrb[0].mxu0
    %v503 = vadd.f32 0.0, %v502
    %v504 = vpop.f32.mrb[0].mxu0
    %505 = vdwg.mxu0
    %v506 = vsel %vm424, %v235, 0.0
    %507 = vadd.xlane.f32.xlu0 %v506
    %v508 = vpop.xlane.xlu0 %507
    %v509 = vrot.slane %v508, 4
    %v510 = vadd.f32 %v508, %v509
    %v511 = vrot.slane %v510, 2
    %v512 = vadd.f32 %v510, %v511
    %v513 = vrot.slane %v512, 1
    %v514 = vadd.f32 %v512, %v513
    %s515 = vtos %v514
    %vm516 = vcmask 9216
    %v517 = vsel %vm516, %v503, 0.0
    %518 = vadd.xlane.f32.xlu0 %v517
    %v519 = vpop.xlane.xlu0 %518
    %v520 = vrot.slane %v519, 4
    %v521 = vadd.f32 %v519, %v520
    %v522 = vrot.slane %v521, 2
    %v523 = vadd.f32 %v521, %v522
    %v524 = vrot.slane %v523, 1
    %v525 = vadd.f32 %v523, %v524
    %s526 = vtos %v525
    %v527 = vsel %vm516, %v503, -inf
    %528 = vmax.xlane.f32.xlu0 %v527
    %v529 = vpop.xlane.xlu0 %528
    %v530 = vsub.f32 %v503, %v529
    %v531 = vmul.f32 %v530, 1.442695
    %v532 = vpow.pop %v531
    %v533 = vsel %vm516, %v532, 0.0
    %534 = vadd.xlane.f32.xlu0 %v533
    %v535 = vpop.xlane.xlu0 %534
    %v536 = vlog2.pop %v535
    %v537 = vmul.f32 %v536, 0.6931472
    %v538 = vadd.f32 %v529, %v537
    %v539 = vsel %vm424, %v538, 0.0
    %540 = vadd.xlane.f32.xlu0 %v539
    %v541 = vpop.xlane.xlu0 %540
    %v542 = vrot.slane %v541, 4
    %v543 = vadd.f32 %v541, %v542
    %v544 = vrot.slane %v543, 2
    %v545 = vadd.f32 %v543, %v544
    %v546 = vrot.slane %v545, 1
    %v547 = vadd.f32 %v545, %v546
    %s548 = vtos %v547
    %v549 = vrot.slane %v527, 4
    %v550 = vmax.f32 %v527, %v549
    %v551 = vrot.slane %v550, 2
    %v552 = vmax.f32 %v550, %v551
    %v553 = vrot.slane %v552, 1
    %v554 = vmax.f32 %v552, %v553
    %v555 = vsub.f32 %v503, %v554
    %v556 = vmul.f32 %v555, 1.442695
    %v557 = vpow.pop %v556
    %v558 = vsel %vm516, %v557, 0.0
    %v559 = vrot.slane %v558, 4
    %v560 = vadd.f32 %v558, %v559
    %v561 = vrot.slane %v560, 2
    %v562 = vadd.f32 %v560, %v561
    %v563 = vrot.slane %v562, 1
    %v564 = vadd.f32 %v562, %v563
    %v565 = vlog2.pop %v564
    %v566 = vmul.f32 %v565, 0.6931472
    %v567 = vadd.f32 %v554, %v566
    %vm568 = vcmask 8192
    %v569 = vsel %vm568, %v567, 0.0
    %570 = vadd.xlane.f32.xlu0 %v569
    %v571 = vpop.xlane.xlu0 %570
    %v572 = vrot.slane %v571, 4
    %v573 = vadd.f32 %v571, %v572
    %v574 = vrot.slane %v573, 2
    %v575 = vadd.f32 %v573, %v574
    %v576 = vrot.slane %v575, 1
    %v577 = vadd.f32 %v575, %v576
    %s578 = vtos %v577
    %s579 = ssub.f32 %s515, %s548
    %s580 = smul.f32 %s579, 0.9
    %s581 = smul.f32 %s548, 2.0
    %s582 = ssub.f32 %s526, %s581
    %s583 = smul.f32 %s582, 0.05
    %s584 = sadd.f32 %s580, %s583
    %s585 = ssub.f32 0.0, %s584
    %s586 = smul.f32 %s585, 0.5
    %s587 = ssub.f32 %s515, %s578
    %s588 = smul.f32 %s587, 0.9
    %s589 = smul.f32 %s578, 2.0
    %s590 = ssub.f32 %s526, %s589
    %s591 = smul.f32 %s590, 0.05
    %s592 = sadd.f32 %s588, %s591
    %s593 = ssub.f32 0.0, %s592
    %s594 = smul.f32 %s593, 0.5
    %s595 = sadd.f32 %s586, %s594
    %s596 = smul.f32 %s595, 0.5
    %s597 = sadd.f32 %s435, %s596
    %s598 = scalar_lea.smem [#allocation2], 0
    %599 = sst [smem:[%s598]] %s597
    // Predicated region
    $region30: #{contrastive_alignment_forward.1} parent=1 // pred_check
      _
    $region31: #{contrastive_alignment_forward.1} parent=1 // pred_check_branch
      %601 = sbr.rel (0) target = $region33
    $region32: #{contrastive_alignment_forward.1} parent=1 // pred_region
      %s603 = ssub.s32 16, 16
      %604 = vsyncadd [#allocation3], %s603
      %607 = dma.smem_to_hbm [#allocation2], 16, %s7, [#allocation3]
    $region33: #{contrastive_alignment_forward.1} parent=1 // pred_fallthru
      _
    // Predicated region
    $region34: #{contrastive_alignment_forward.1} parent=1 // pred_check
      _
    $region35: #{contrastive_alignment_forward.1} parent=1 // pred_check_branch
      %609 = sbr.rel (0) target = $region37
    $region36: #{contrastive_alignment_forward.1} parent=1 // pred_region
      _
    $region37: #{contrastive_alignment_forward.1} parent=1 // pred_fallthru
      _
    // Predicated region
    $region38: #{contrastive_alignment_forward.1} parent=1 // pred_check
      _
    $region39: #{contrastive_alignment_forward.1} parent=1 // pred_check_branch
      %611 = sbr.rel (0) target = $region41
    $region40: #{contrastive_alignment_forward.1} parent=1 // pred_region
      _
    $region41: #{contrastive_alignment_forward.1} parent=1 // pred_fallthru
      _
    // Predicated region
    $region42: #{contrastive_alignment_forward.1} parent=1 // pred_check
      _
    $region43: #{contrastive_alignment_forward.1} parent=1 // pred_check_branch
      %613 = sbr.rel (0) target = $region45
    $region44: #{contrastive_alignment_forward.1} parent=1 // pred_region
      %614 = dma.done [#allocation3], 16
    $region45: #{contrastive_alignment_forward.1} parent=1 // pred_fallthru
      _
    // Predicated region
    $region46: #{contrastive_alignment_forward.1} parent=1 // pred_check
      _
    $region47: #{contrastive_alignment_forward.1} parent=1 // pred_check_branch
      %616 = sbr.rel (0) target = $region49
    $region48: #{contrastive_alignment_forward.1} parent=1 // pred_region
      _
    $region49: #{contrastive_alignment_forward.1} parent=1 // pred_fallthru
      _
    // Predicated region
    $region50: #{contrastive_alignment_forward.1} parent=1 // pred_check
      _
    $region51: #{contrastive_alignment_forward.1} parent=1 // pred_check_branch
      %618 = sbr.rel (0) target = $region53
    $region52: #{contrastive_alignment_forward.1} parent=1 // pred_region
      _
    $region53: #{contrastive_alignment_forward.1} parent=1 // pred_fallthru
      _
    %619 = sfence
    %620 = vsyncpa [#allocation3], 1

</llo_original>
